<compile_context>
chip_gen: v7x
topology: tpu7x:2x2x1
jax: 0.10.0
libtpu: 0.0.40
codegen_flags: <defaults>
</compile_context>

<pallas_src>
import functools

import jax
import jax.numpy as jnp
from jax.experimental import pallas as pl
from jax.experimental.pallas import tpu as pltpu

_MIB = 1024 * 1024

# Per-buffer tile budget for the tiled copy path.  Double-buffered input +
# output peaks at ~4x this (~32 MiB), which fits the scoped-VMEM limit we
# request on every generation (including v7x's 64 MiB physical VMEM).
_TILE_BYTES_CAP = 8 * _MIB

# Lane (last-dim) widths tried for the lane-dense slab (all multiples of 128).
_LANE_WIDTHS = (2048, 1024, 512, 256, 128)


def _min_sublane(dtype) -> int:
    """Sublane multiple required for a non-full block dim: 8/16/32 rows."""
    return {4: 8, 2: 16, 1: 32}.get(jnp.dtype(dtype).itemsize, 8)


@functools.lru_cache(maxsize=None)
def _vmem_limit_bytes() -> int:
    """Generation-aware scoped-VMEM request.

    v5e/v6e (128 MiB physical) -> 64 MiB; v7x (64 MiB physical) -> 48 MiB.
    Falls back to 48 MiB (safe on every generation) if the hardware query is
    unavailable.
    """
    try:
        cap = int(pltpu.get_tpu_info().vmem_capacity_bytes)
    except Exception:
        cap = 64 * _MIB
    return min(64 * _MIB, (cap * 3) // 4)


def _choose_tiling(numel: int, dtype):
    """Pick (rows, cols, tm) for a lane-dense slab, or None if numel % 128 != 0.

    Searches all lane widths and maximizes per-step tile bytes (up to
    _TILE_BYTES_CAP).  rows % tm == 0 is NOT required: the grid uses pl.cdiv
    and Pallas masks the ragged last block (safe for an identity copy).  If
    the whole slab fits in one tile it is split in two so both TensorCores
    get work on v7x.
    """
    itemsize = jnp.dtype(dtype).itemsize
    min_sub = _min_sublane(dtype)
    best = None  # (tile_bytes, rows, cols, tm)
    for cols in _LANE_WIDTHS:
        if numel % cols:
            continue
        rows = numel // cols
        max_tm = _TILE_BYTES_CAP // (cols * itemsize)
        if rows <= max_tm:
            tm = rows                       # full dim -> always a legal block
        else:
            tm = (max_tm // min_sub) * min_sub
            if tm == 0:
                continue                    # cannot meet (8,128) alignment
        tile_bytes = tm * cols * itemsize
        if best is None or tile_bytes > best[0]:
            best = (tile_bytes, rows, cols, tm)
    if best is None:
        return None
    _, rows, cols, tm = best
    # A 1-step grid leaves a TensorCore idle on v7x; split when possible.
    if tm == rows and rows >= 2 * min_sub:
        half = -(-rows // 2)
        tm_half = -(-half // min_sub) * min_sub
        if tm_half < rows:
            tm = tm_half
    return rows, cols, tm


def _copy_kernel(x_ref, o_ref):
    # Pure identity copy of one lane-dense tile.
    o_ref[...] = x_ref[...]


def _tiled_identity_copy(x2d: jax.Array, tm: int) -> jax.Array:
    """Tiled, double-buffered HBM->VMEM->HBM identity copy of a 2-D slab."""
    rows, cols = x2d.shape
    itemsize = jnp.dtype(x2d.dtype).itemsize
    return pl.pallas_call(
        _copy_kernel,
        out_shape=jax.ShapeDtypeStruct((rows, cols), x2d.dtype),
        grid=(pl.cdiv(rows, tm),),
        in_specs=[pl.BlockSpec((tm, cols), lambda i: (i, 0))],
        out_specs=pl.BlockSpec((tm, cols), lambda i: (i, 0)),
        compiler_params=pltpu.CompilerParams(
            dimension_semantics=("parallel",),  # shard row tiles across TCs (v7x)
            vmem_limit_bytes=_vmem_limit_bytes(),
        ),
        cost_estimate=pl.CostEstimate(
            flops=0,
            transcendentals=0,
            bytes_accessed=2 * rows * cols * itemsize,
        ),
    )(x2d)


def _dma_copy_kernel(x_hbm_ref, o_hbm_ref, sem):
    copy = pltpu.make_async_copy(x_hbm_ref, o_hbm_ref, sem)
    copy.start()
    copy.wait()


def _dma_identity_copy(x: jax.Array) -> jax.Array:
    """Single direct HBM->HBM DMA: no VMEM staging, no tiling constraints."""
    itemsize = jnp.dtype(x.dtype).itemsize
    return pl.pallas_call(
        _dma_copy_kernel,
        out_shape=jax.ShapeDtypeStruct(x.shape, x.dtype),
        in_specs=[pl.BlockSpec(memory_space=pl.ANY)],
        out_specs=pl.BlockSpec(memory_space=pl.ANY),
        scratch_shapes=[pltpu.SemaphoreType.DMA],
        cost_estimate=pl.CostEstimate(
            flops=0, transcendentals=0, bytes_accessed=2 * x.size * itemsize),
    )(x)


def _pallas_identity_copy(x: jax.Array) -> jax.Array:
    tiling = _choose_tiling(x.size, x.dtype)
    if tiling is None:
        # Element count not a multiple of 128: direct HBM->HBM DMA.
        return _dma_identity_copy(x)
    rows, cols, tm = tiling
    y2d = _tiled_identity_copy(jnp.reshape(x, (rows, cols)), tm)
    return jnp.reshape(y2d, x.shape)


class Reshape:
    """JAX/Pallas equivalent of the PyTorch Reshape module.

    forward(x):  N = x.shape[0]
        numel(x) <  N*r*r  ->  x.view(N, -1, r, 1)
        otherwise          ->  x.view(N, -1, r, r)

    A .view() is free, so the default implementation is a metadata-only
    jnp.reshape (zero HBM traffic).  Routing the data through a Pallas
    identity-copy kernel (2x numel of HBM traffic for zero work) is strictly
    opt-in via `min_pallas_bytes`: set it to a byte threshold (e.g. 0) only
    when an explicit kernel boundary / materialized copy is wanted.
    """

    def __init__(self, fc_dim, reduced_feature_dim, min_pallas_bytes=None):
        self.fc_dim = fc_dim
        self.reduced_feature_dim = reduced_feature_dim
        self.min_pallas_bytes = min_pallas_bytes

    def __call__(self, x: jax.Array) -> jax.Array:
        N = x.shape[0]
        r = self.reduced_feature_dim
        numel = x.size
        # torch.numel(x) < N * r * r is a static shape decision in JAX.
        out_shape = (N, -1, r, 1) if numel < N * r * r else (N, -1, r, r)

        y = x
        if (self.min_pallas_bytes is not None and numel > 0
                and numel * jnp.dtype(x.dtype).itemsize >= self.min_pallas_bytes):
            y = _pallas_identity_copy(x)
        return jnp.reshape(y, out_shape)


if __name__ == "__main__":
    key = jax.random.PRNGKey(0)
    k1, k2, k3, k4, k5 = jax.random.split(key, 5)
    r = 4  # reduced_feature_dim

    # ---- Default hot path: metadata-only reshape, no Pallas copy ------------
    x1 = jax.random.normal(k1, (2, 4, 16, 16), dtype=jnp.float32)
    ref1 = jnp.reshape(x1, (2, -1, r, r))
    y1 = jax.block_until_ready(Reshape(fc_dim=4 * 16 * 16, reduced_feature_dim=r)(x1))
    assert y1.shape == (2, 64, 4, 4), y1.shape
    assert jnp.array_equal(y1, ref1)

    # ---- Too few elements -> [N, -1, r, 1] branch ----------------------------
    x2 = jax.random.normal(k2, (2, 8), dtype=jnp.float32)
    ref2 = jnp.reshape(x2, (2, -1, r, 1))
    y2 = jax.block_until_ready(Reshape(fc_dim=8, reduced_feature_dim=r)(x2))
    assert y2.shape == (2, 2, 4, 1), y2.shape
    assert jnp.array_equal(y2, ref2)

    # ---- Opt-in Pallas copy: lane-dense tiled kernel, 2-step parallel grid ---
    # (48, 32, 64) f32 -> slab (48, 2048), tm=24, grid=(2,).
    x3 = jax.random.normal(k3, (48, 32, 64), dtype=jnp.float32)
    ref3 = jnp.reshape(x3, (48, -1, r, r))
    y3 = jax.block_until_ready(
        Reshape(fc_dim=32 * 64, reduced_feature_dim=r, min_pallas_bytes=0)(x3))
    assert y3.shape == (48, 128, 4, 4), y3.shape
    assert jnp.array_equal(y3, ref3)

    # ---- Opt-in Pallas copy with a ragged last block (rows=25, tm=16) --------
    x4 = jax.random.normal(k4, (40, 8, 8, 10), dtype=jnp.float32)
    ref4 = jnp.reshape(x4, (40, -1, r, r))
    y4 = jax.block_until_ready(
        Reshape(fc_dim=8 * 8 * 10, reduced_feature_dim=r, min_pallas_bytes=0)(x4))
    assert y4.shape == (40, 40, 4, 4), y4.shape
    assert jnp.array_equal(y4, ref4)

    # ---- Opt-in Pallas copy, numel not a multiple of 128 -> HBM->HBM DMA -----
    x5 = jax.random.normal(k5, (6, 96), dtype=jnp.float32)
    ref5 = jnp.reshape(x5, (6, -1, r, r))
    y5 = jax.block_until_ready(
        Reshape(fc_dim=96, reduced_feature_dim=r, min_pallas_bytes=0)(x5))
    assert y5.shape == (6, 6, 4, 4), y5.shape
    assert jnp.array_equal(y5, ref5)

    print("KERNEL_OK")
</pallas_src>

<mosaic_0001>
module attributes {stable_mosaic.version = 11 : i64} {
  func.func @_copy_kernel(%arg0: i32, %arg1: memref<24x2048xf32, #tpu.memory_space<vmem>>, %arg2: memref<24x2048xf32, #tpu.memory_space<vmem>>) attributes {dimension_semantics = [#tpu.dimension_semantics<parallel>], iteration_bounds = array<i64: 2>, scalar_prefetch = 0 : i64, scratch_operands = 0 : i64, tpu.core_type = #tpu.core_type<tc>, window_params = [{transform_indices = @transform_0, window_bounds = array<i64: 24, 2048>}, {transform_indices = @transform_1, window_bounds = array<i64: 24, 2048>}]} {
    %c0 = arith.constant 0 : index
    %c0_0 = arith.constant 0 : index
    %0 = vector.load %arg1[%c0, %c0_0] : memref<24x2048xf32, #tpu.memory_space<vmem>>, vector<24x2048xf32>
    %c0_1 = arith.constant 0 : index
    %c0_2 = arith.constant 0 : index
    %1 = vector.load %arg2[%c0_1, %c0_2] : memref<24x2048xf32, #tpu.memory_space<vmem>>, vector<24x2048xf32>
    tpu.vector_store %arg2[%c0_1, %c0_2], %0 {strides = array<i32>} : memref<24x2048xf32, #tpu.memory_space<vmem>>, vector<24x2048xf32>,
    return
  }
  func.func @transform_0(%arg0: i32) -> (i32, i32) {
    %c0_i32 = arith.constant 0 : i32
    %c0_i32_0 = arith.constant 0 : i32
    return %arg0, %c0_i32 : i32, i32
  }
  func.func @transform_1(%arg0: i32) -> (i32, i32) {
    %c0_i32 = arith.constant 0 : i32
    %c0_i32_0 = arith.constant 0 : i32
    return %arg0, %c0_i32 : i32, i32
  }
}

</mosaic_0001>

<llo_original>
// kernel: tpu_custom_call.1
$region0: #{tpu_custom_call.1}
  #allocation0 [shape = 'u32[]', space=smem, size = 0x4, offset = 0x4, fixed_abs, tag = 'smem constant byte address 0x4 - core index']
  #allocation1 [shape = 'u32[144,128]{1,0:T(1,128)}', space=vmem, size = 0x12000, scoped, tag = 'internal scratch']
  %s0 = inlined_call_operand.hbm [shape: f32[48,2048], index: 0, kind: input, shape index: {}]
  %s1 = inlined_call_operand.hbm [shape: f32[48,2048], index: 1, kind: output, shape index: {}]
  %s2 = sld [smem:[#allocation0]]
  $region41: #{tpu_custom_call.1} parent=0
    _
  %s4 = ssub.s32 1, %s2
  %s5 = scalar_select 0, %s4, %s2
  $region1: #{tpu_custom_call.1} parent=0
    #allocation2 [shape = 'u8[393216]{0}', space=vmem, size = 0x60000, scoped, tag = 'input window, operand 0']
    #allocation3 [shape = 's32[2]{0}', space=sflag, size = 0x8, scoped, tag = 'scoped memory for tpu_custom_call.1']
    #allocation4 [shape = 's32[2]{0}', space=sflag, size = 0x8, scoped, tag = 'scoped memory for tpu_custom_call.1']
    #allocation5 [shape = 'u8[393216]{0}', space=vmem, size = 0x60000, scoped, tag = 'output window, operand 0']
    %6 = vsyncpa [#allocation3], 0
    %s7 = scalar_lea.sflag [#allocation3], 1
    %8 = vsyncpa %s7, 0
    %9 = vsyncpa [#allocation4], 0
    %s10 = scalar_lea.sflag [#allocation4], 1
    %11 = vsyncpa %s10, 0
    loop: start=0, step=1, limit=4
    $region2: #{tpu_custom_call.1} parent=1 // loop_pre_header
      _
    $region3: #{tpu_custom_call.1} parent=1 // loop_header
      %s13 = sphi 0, %s17
      %p14 = scmp.ge.s32.totalorder %s13, 4
      %s23 = sphi 0, %s25
      %s26 = sphi 0, %s23
      %s27 = sphi 0, %s26
      %s43 = sphi 0, %s27
      %s49 = sphi 0, %s51
      %s52 = sphi 0, %s49
      %s53 = sphi 0, %s52
      %s69 = sphi 0, %s53
    $region4: #{tpu_custom_call.1} parent=1 // loop_header_branch
      %16 = sbr.rel (%p14) target = $region8
    $region5: #{tpu_custom_call.1} parent=1 // loop_body
      %s18 = ssub.s32 %s13, 1
      %s19 = ssub.s32 %s13, 2
      %s20 = sadd.s32 %s13, 1
      %s21 = ssub.s32 %s13, %s20
      %p22 = scmp.eq.s32.totalorder %s21, 0
      %s24 = sadd.s32 %s23, 1
      %s25 = scalar_select %p22, %s23, %s24
      %p28 = pneg %p22
      %p29 = scmp.eq.s32.totalorder %s13, 1
      %p30 = por %p28, %p29
      %p31 = scmp.ne.s32.totalorder %s23, %s26
      %p32 = scmp.eq.s32.totalorder %s13, 0
      %p33 = por %p31, %p32
      %p34 = scmp.ne.s32.totalorder %s23, %s26
      %p35 = scmp.eq.s32.totalorder %s18, 1
      %p36 = por %p34, %p35
      %p37 = scmp.ne.s32.totalorder %s26, %s27
      %p38 = scmp.eq.s32.totalorder %s18, 0
      %p39 = por %p37, %p38
      %p40 = scmp.ne.s32.totalorder %s26, %s27
      %p41 = scmp.eq.s32.totalorder %s19, 1
      %p42 = por %p40, %p41
      %p44 = scmp.ne.s32.totalorder %s27, %s43
      %p45 = scmp.eq.s32.totalorder %s19, 0
      %p46 = por %p44, %p45
      %s47 = ssub.s32 %s13, %s20
      %p48 = scmp.eq.s32.totalorder %s47, 0
      %s50 = sadd.s32 %s49, 1
      %s51 = scalar_select %p48, %s49, %s50
      %p54 = pneg %p48
      %p55 = scmp.eq.s32.totalorder %s13, 1
      %p56 = por %p54, %p55
      %p57 = scmp.ne.s32.totalorder %s49, %s52
      %p58 = scmp.eq.s32.totalorder %s13, 0
      %p59 = por %p57, %p58
      %p60 = scmp.ne.s32.totalorder %s49, %s52
      %p61 = scmp.eq.s32.totalorder %s18, 1
      %p62 = por %p60, %p61
      %p63 = scmp.ne.s32.totalorder %s52, %s53
      %p64 = scmp.eq.s32.totalorder %s18, 0
      %p65 = por %p63, %p64
      %p66 = scmp.ne.s32.totalorder %s52, %s53
      %p67 = scmp.eq.s32.totalorder %s19, 1
      %p68 = por %p66, %p67
      %p70 = scmp.ne.s32.totalorder %s53, %s69
      %p71 = scmp.eq.s32.totalorder %s19, 0
      %p72 = por %p70, %p71
      %p73 = scmp.le.s32.totalorder 1, %s13
      %p74 = scmp.lt.s32.totalorder %s13, 3
      %p75 = pnand %p73, %p74
      %p76 = pneg %p75
      // Predicated region
      $region9: #{tpu_custom_call.1} parent=5 // pred_check
        _
      $region10: #{tpu_custom_call.1} parent=5 // pred_check_branch
        %78 = sbr.rel (%p75) target = $region12
      $region11: #{tpu_custom_call.1} parent=5 // pred_region
        %s79 = ssub.s32 %s13, 1
      $region12: #{tpu_custom_call.1} parent=5 // pred_fallthru
        _
      %p80 = scmp.lt.s32.totalorder %s13, 2
      // Predicated region
      $region13: #{tpu_custom_call.1} parent=5 // pred_check
        %p81 = pneg %p80
      $region14: #{tpu_custom_call.1} parent=5 // pred_check_branch
        %83 = sbr.rel (%p81) target = $region16
      $region15: #{tpu_custom_call.1} parent=5 // pred_region
        // Predicated region
        $region17: #{tpu_custom_call.1} parent=15 // pred_check
          %p84 = pneg %p33
        $region18: #{tpu_custom_call.1} parent=15 // pred_check_branch
          %86 = sbr.rel (%p84) target = $region20
        $region19: #{tpu_custom_call.1} parent=15 // pred_region
          %s87 = sand.u32 %s23, 1
          %s88 = scalar_lea.sflag [#allocation3], %s87
          %s89 = sand.u32 %s23, 1
          %s90 = smul.addr %s89, 384
          %s91 = scalar_lea.vmem [#allocation2], %s90
          %s92 = smul.u32 3, %s13
          %s94 = ssub.s32 6144, 6144
          %95 = vsyncadd %s88, %s94
          %s96 = smul.addr %s92, 16
          %s97 = smul.addr %s96, 128
          %s98 = scalar_lea.hbm %s0, %s97
          %s99 = sshll.u32 %s91, 4
          %s100 = int_to_ptr.vmem [resolvable:$true] %s99
          %105 = dma.hbm_to_vmem [thread:$0]  %s98, 6144, %s100, %s88, 2048, 2048, 128
        $region20: #{tpu_custom_call.1} parent=15 // pred_fallthru
          _
      $region16: #{tpu_custom_call.1} parent=5 // pred_fallthru
        _
      %p106 = scmp.le.s32.totalorder 1, %s13
      %p107 = scmp.lt.s32.totalorder %s13, 3
      %p108 = pnand %p106, %p107
      %p109 = pneg %p108
      // Predicated region
      $region21: #{tpu_custom_call.1} parent=5 // pred_check
        _
      $region22: #{tpu_custom_call.1} parent=5 // pred_check_branch
        %111 = sbr.rel (%p108) target = $region24
      $region23: #{tpu_custom_call.1} parent=5 // pred_region
        %s112 = ssub.s32 %s13, 1
        %s113 = sand.u32 %s26, 1
        %s114 = scalar_lea.sflag [#allocation3], %s113
        %s115 = sand.u32 %s26, 1
        %s116 = smul.addr %s115, 384
        %s117 = scalar_lea.vmem [#allocation2], %s116
        // Predicated region
        $region25: #{tpu_custom_call.1} parent=23 // pred_check
          %p118 = pneg %p39
        $region26: #{tpu_custom_call.1} parent=23 // pred_check_branch
          %120 = sbr.rel (%p118) target = $region28
        $region27: #{tpu_custom_call.1} parent=23 // pred_region
          %121 = dma.done %s114, 6144
        $region28: #{tpu_custom_call.1} parent=23 // pred_fallthru
          _
        %s122 = sand.u32 %s26, 1
        %s123 = scalar_lea.sflag [#allocation3], %s122
        %s124 = sand.u32 %s26, 1
        %s125 = smul.addr %s124, 384
        %s126 = scalar_lea.vmem [#allocation2], %s125
        %p127 = pneg %p39
        %p128 = pneg %p36
        %p129 = pneg %p65
        %p130 = pneg %p62
        %s131 = sand.u32 %s52, 1
        %s132 = scalar_lea.sflag [#allocation4], %s131
        %s133 = sand.u32 %s52, 1
        %s134 = smul.addr %s133, 384
        %s135 = scalar_lea.vmem [#allocation5], %s134
        %s136 = smul.u32 3, %s18
        %s137 = smul.u32 3, %s18
        %v138 = vld [vmem:[%s117] sm:$0xff]
        %v139 = vld [vmem:[%s117 + $0x8] sm:$0xff]
        %v140 = vld [vmem:[%s117 + $0x10] sm:$0xff]
        %v141 = vld [vmem:[%s117 + $0x18] sm:$0xff]
        %v142 = vld [vmem:[%s117 + $0x20] sm:$0xff]
        %v143 = vld [vmem:[%s117 + $0x28] sm:$0xff]
        %v144 = vld [vmem:[%s117 + $0x30] sm:$0xff]
        %v145 = vld [vmem:[%s117 + $0x38] sm:$0xff]
        %v146 = vld [vmem:[%s117 + $0x40] sm:$0xff]
        %v147 = vld [vmem:[%s117 + $0x48] sm:$0xff]
        %v148 = vld [vmem:[%s117 + $0x50] sm:$0xff]
        %v149 = vld [vmem:[%s117 + $0x58] sm:$0xff]
        %v150 = vld [vmem:[%s117 + $0x60] sm:$0xff]
        %v151 = vld [vmem:[%s117 + $0x68] sm:$0xff]
        %v152 = vld [vmem:[%s117 + $0x70] sm:$0xff]
        %v153 = vld [vmem:[%s117 + $0x78] sm:$0xff]
        %v154 = vld [vmem:[%s117 + $0x80] sm:$0xff]
        %v155 = vld [vmem:[%s117 + $0x88] sm:$0xff]
        %v156 = vld [vmem:[%s117 + $0x90] sm:$0xff]
        %v157 = vld [vmem:[%s117 + $0x98] sm:$0xff]
        %v158 = vld [vmem:[%s117 + $0xa0] sm:$0xff]
        %v159 = vld [vmem:[%s117 + $0xa8] sm:$0xff]
        %v160 = vld [vmem:[%s117 + $0xb0] sm:$0xff]
        %v161 = vld [vmem:[%s117 + $0xb8] sm:$0xff]
        %v162 = vld [vmem:[%s117 + $0xc0] sm:$0xff]
        %v163 = vld [vmem:[%s117 + $0xc8] sm:$0xff]
        %v164 = vld [vmem:[%s117 + $0xd0] sm:$0xff]
        %v165 = vld [vmem:[%s117 + $0xd8] sm:$0xff]
        %v166 = vld [vmem:[%s117 + $0xe0] sm:$0xff]
        %v167 = vld [vmem:[%s117 + $0xe8] sm:$0xff]
        %v168 = vld [vmem:[%s117 + $0xf0] sm:$0xff]
        %v169 = vld [vmem:[%s117 + $0xf8] sm:$0xff]
        %v170 = vld [vmem:[%s117 + $0x100] sm:$0xff]
        %v171 = vld [vmem:[%s117 + $0x108] sm:$0xff]
        %v172 = vld [vmem:[%s117 + $0x110] sm:$0xff]
        %v173 = vld [vmem:[%s117 + $0x118] sm:$0xff]
        %v174 = vld [vmem:[%s117 + $0x120] sm:$0xff]
        %v175 = vld [vmem:[%s117 + $0x128] sm:$0xff]
        %v176 = vld [vmem:[%s117 + $0x130] sm:$0xff]
        %v177 = vld [vmem:[%s117 + $0x138] sm:$0xff]
        %v178 = vld [vmem:[%s117 + $0x140] sm:$0xff]
        %v179 = vld [vmem:[%s117 + $0x148] sm:$0xff]
        %v180 = vld [vmem:[%s117 + $0x150] sm:$0xff]
        %v181 = vld [vmem:[%s117 + $0x158] sm:$0xff]
        %v182 = vld [vmem:[%s117 + $0x160] sm:$0xff]
        %v183 = vld [vmem:[%s117 + $0x168] sm:$0xff]
        %v184 = vld [vmem:[%s117 + $0x170] sm:$0xff]
        %v185 = vld [vmem:[%s117 + $0x178] sm:$0xff]
        %186 = vst [vmem:[%s135] sm:$0xff] %v138
        %187 = vst [vmem:[%s135 + $0x8] sm:$0xff] %v139
        %188 = vst [vmem:[%s135 + $0x10] sm:$0xff] %v140
        %189 = vst [vmem:[%s135 + $0x18] sm:$0xff] %v141
        %190 = vst [vmem:[%s135 + $0x20] sm:$0xff] %v142
        %191 = vst [vmem:[%s135 + $0x28] sm:$0xff] %v143
        %192 = vst [vmem:[%s135 + $0x30] sm:$0xff] %v144
        %193 = vst [vmem:[%s135 + $0x38] sm:$0xff] %v145
        %194 = vst [vmem:[%s135 + $0x40] sm:$0xff] %v146
        %195 = vst [vmem:[%s135 + $0x48] sm:$0xff] %v147
        %196 = vst [vmem:[%s135 + $0x50] sm:$0xff] %v148
        %197 = vst [vmem:[%s135 + $0x58] sm:$0xff] %v149
        %198 = vst [vmem:[%s135 + $0x60] sm:$0xff] %v150
        %199 = vst [vmem:[%s135 + $0x68] sm:$0xff] %v151
        %200 = vst [vmem:[%s135 + $0x70] sm:$0xff] %v152
        %201 = vst [vmem:[%s135 + $0x78] sm:$0xff] %v153
        %202 = vst [vmem:[%s135 + $0x80] sm:$0xff] %v154
        %203 = vst [vmem:[%s135 + $0x88] sm:$0xff] %v155
        %204 = vst [vmem:[%s135 + $0x90] sm:$0xff] %v156
        %205 = vst [vmem:[%s135 + $0x98] sm:$0xff] %v157
        %206 = vst [vmem:[%s135 + $0xa0] sm:$0xff] %v158
        %207 = vst [vmem:[%s135 + $0xa8] sm:$0xff] %v159
        %208 = vst [vmem:[%s135 + $0xb0] sm:$0xff] %v160
        %209 = vst [vmem:[%s135 + $0xb8] sm:$0xff] %v161
        %210 = vst [vmem:[%s135 + $0xc0] sm:$0xff] %v162
        %211 = vst [vmem:[%s135 + $0xc8] sm:$0xff] %v163
        %212 = vst [vmem:[%s135 + $0xd0] sm:$0xff] %v164
        %213 = vst [vmem:[%s135 + $0xd8] sm:$0xff] %v165
        %214 = vst [vmem:[%s135 + $0xe0] sm:$0xff] %v166
        %215 = vst [vmem:[%s135 + $0xe8] sm:$0xff] %v167
        %216 = vst [vmem:[%s135 + $0xf0] sm:$0xff] %v168
        %217 = vst [vmem:[%s135 + $0xf8] sm:$0xff] %v169
        %218 = vst [vmem:[%s135 + $0x100] sm:$0xff] %v170
        %219 = vst [vmem:[%s135 + $0x108] sm:$0xff] %v171
        %220 = vst [vmem:[%s135 + $0x110] sm:$0xff] %v172
        %221 = vst [vmem:[%s135 + $0x118] sm:$0xff] %v173
        %222 = vst [vmem:[%s135 + $0x120] sm:$0xff] %v174
        %223 = vst [vmem:[%s135 + $0x128] sm:$0xff] %v175
        %224 = vst [vmem:[%s135 + $0x130] sm:$0xff] %v176
        %225 = vst [vmem:[%s135 + $0x138] sm:$0xff] %v177
        %226 = vst [vmem:[%s135 + $0x140] sm:$0xff] %v178
        %227 = vst [vmem:[%s135 + $0x148] sm:$0xff] %v179
        %228 = vst [vmem:[%s135 + $0x150] sm:$0xff] %v180
        %229 = vst [vmem:[%s135 + $0x158] sm:$0xff] %v181
        %230 = vst [vmem:[%s135 + $0x160] sm:$0xff] %v182
        %231 = vst [vmem:[%s135 + $0x168] sm:$0xff] %v183
        %232 = vst [vmem:[%s135 + $0x170] sm:$0xff] %v184
        %233 = vst [vmem:[%s135 + $0x178] sm:$0xff] %v185
        %s234 = sand.u32 %s52, 1
        %s235 = scalar_lea.sflag [#allocation4], %s234
        %s236 = sand.u32 %s52, 1
        %s237 = smul.addr %s236, 384
        %s238 = scalar_lea.vmem [#allocation5], %s237
        // Predicated region
        $region29: #{tpu_custom_call.1} parent=23 // pred_check
          %p239 = pneg %p62
        $region30: #{tpu_custom_call.1} parent=23 // pred_check_branch
          %241 = sbr.rel (%p239) target = $region32
        $region31: #{tpu_custom_call.1} parent=23 // pred_region
          %s242 = smul.u32 3, %s18
          %s244 = ssub.s32 6144, 6144
          %245 = vsyncadd %s235, %s244
          %s246 = smul.addr %s242, 16
          %s247 = smul.addr %s246, 128
          %s248 = scalar_lea.hbm %s1, %s247
          %s249 = sshll.u32 %s238, 4
          %s250 = int_to_ptr.vmem [resolvable:$true] %s249
          %255 = dma.vmem_to_hbm [thread:$0]  %s250, 6144, %s248, %s235, 2048, 2048, 128
        $region32: #{tpu_custom_call.1} parent=23 // pred_fallthru
          _
      $region24: #{tpu_custom_call.1} parent=5 // pred_fallthru
        _
      %p256 = scmp.le.s32.totalorder 2, %s13
      // Predicated region
      $region33: #{tpu_custom_call.1} parent=5 // pred_check
        %p257 = pneg %p256
      $region34: #{tpu_custom_call.1} parent=5 // pred_check_branch
        %259 = sbr.rel (%p257) target = $region36
      $region35: #{tpu_custom_call.1} parent=5 // pred_region
        %s260 = ssub.s32 %s13, 2
        // Predicated region
        $region37: #{tpu_custom_call.1} parent=35 // pred_check
          %p261 = pneg %p68
        $region38: #{tpu_custom_call.1} parent=35 // pred_check_branch
          %263 = sbr.rel (%p261) target = $region40
        $region39: #{tpu_custom_call.1} parent=35 // pred_region
          %s264 = sand.u32 %s53, 1
          %s265 = scalar_lea.sflag [#allocation4], %s264
          %s266 = sand.u32 %s53, 1
          %s267 = smul.addr %s266, 384
          %s268 = scalar_lea.vmem [#allocation5], %s267
          %269 = dma.done %s265, 6144
        $region40: #{tpu_custom_call.1} parent=35 // pred_fallthru
          _
      $region36: #{tpu_custom_call.1} parent=5 // pred_fallthru
        _
    $region6: #{tpu_custom_call.1} parent=1 // loop_footer
      %s17 = sadd.s32 1, %s13
    $region7: #{tpu_custom_call.1} parent=1 // loop_footer_branch
      %12 = sbr.rel target = $region3
    $region8: #{tpu_custom_call.1} parent=1 // loop_exit
      _
    %270 = vsyncpa [#allocation3], 1
    %s271 = scalar_lea.sflag [#allocation3], 1
    %272 = vsyncpa %s271, 1
    %273 = vsyncpa [#allocation4], 1
    %s274 = scalar_lea.sflag [#allocation4], 1
    %275 = vsyncpa %s274, 1

</llo_original>
